<compile_context>
chip_gen: v5e
topology: v5e:2x2
jax: 0.10.0
libtpu: 0.0.40
codegen_flags: <defaults>
</compile_context>

<pallas_src>
import numpy as np
import jax
import jax.numpy as jnp
from jax.experimental import pallas as pl
from jax.experimental.pallas import tpu as pltpu

# ---- deterministic "parameters" (module __init__ math, p = 0.05) -----------
P = 0.05
ALPHA = -1.7580993408473766
FIXED_MEAN = 0.0
FIXED_VAR = 1.0
KEEP_PROB = 1.0 - P
A_CONST = float(np.sqrt(
    FIXED_VAR / (KEEP_PROB * ((1.0 - KEEP_PROB) * (ALPHA - FIXED_MEAN) ** 2 + FIXED_VAR))))
B_CONST = float(FIXED_MEAN - A_CONST * (KEEP_PROB * FIXED_MEAN + (1.0 - KEEP_PROB) * ALPHA))
DROPPED_VAL = float(ALPHA * A_CONST + B_CONST)          # value written where dropped
# keep element iff top-24 hash bits >= p * 2^24  (matches: keep iff u >= p)
DROP_THRESH_24 = int(round(P * (1 << 24)))

# Lane-dense layout / tiling constants (generation-portable: ~1 MiB f32 block).
LANE_COLS = 512
MAX_BLOCK_ROWS = 512


def _round_up(x, m):
    return ((x + m - 1) // m) * m


def alpha_drop_kernel(seed_ref, x_ref, o_ref):
    bm, bn = x_ref.shape
    pid = pl.program_id(0)

    # Global linear element index of every element in this block.
    row = jax.lax.broadcasted_iota(jnp.int32, (bm, bn), 0) + pid * bm
    col = jax.lax.broadcasted_iota(jnp.int32, (bm, bn), 1)
    idx = row * bn + col

    # Stateless integer hash (lowbias32) of (index, seed) -> well-mixed uint32.
    seed_u = seed_ref[0].astype(jnp.uint32)
    k = idx.astype(jnp.uint32) + (seed_u + jnp.uint32(1)) * jnp.uint32(0x9E3779B9)
    k = k ^ (k >> jnp.uint32(16))
    k = k * jnp.uint32(0x7FEB352D)
    k = k ^ (k >> jnp.uint32(15))
    k = k * jnp.uint32(0x846CA68B)
    k = k ^ (k >> jnp.uint32(16))

    # Integer-threshold Bernoulli: keep iff top 24 bits >= p * 2^24.
    bits24 = (k >> jnp.uint32(8)).astype(jnp.int32)
    keep = bits24 >= DROP_THRESH_24

    x = x_ref[...].astype(jnp.float32)
    out = jnp.where(keep, x * A_CONST + B_CONST, DROPPED_VAL)
    o_ref[...] = out.astype(o_ref.dtype)


def alpha_drop(x, seed=0, training=True):
    """Alpha dropout (elementwise).  Works for any input shape/size."""
    if (not training) or KEEP_PROB == 1.0:
        return x

    orig_shape = x.shape
    orig_dtype = x.dtype
    total = int(np.prod(orig_shape))

    cols = LANE_COLS
    rows_needed = pl.cdiv(total, cols)
    if rows_needed >= MAX_BLOCK_ROWS:
        block_rows = MAX_BLOCK_ROWS
    else:
        block_rows = _round_up(rows_needed, 8)
    rows = _round_up(rows_needed, block_rows)
    padded = rows * cols

    x_flat = x.reshape(-1)
    if padded != total:
        x_flat = jnp.pad(x_flat, (0, padded - total))
    x2 = x_flat.reshape(rows, cols)

    seed_arr = jnp.array([seed], dtype=jnp.int32)
    grid = (rows // block_rows,)

    out = pl.pallas_call(
        alpha_drop_kernel,
        out_shape=jax.ShapeDtypeStruct((rows, cols), orig_dtype),
        grid_spec=pltpu.PrefetchScalarGridSpec(
            num_scalar_prefetch=1,                     # seed lands in SMEM
            grid=grid,
            in_specs=[pl.BlockSpec((block_rows, cols), lambda i, seed: (i, 0))],
            out_specs=pl.BlockSpec((block_rows, cols), lambda i, seed: (i, 0)),
        ),
        compiler_params=pltpu.CompilerParams(
            dimension_semantics=("parallel",),         # v7x: shard blocks over 2 TCs
            vmem_limit_bytes=32 * 1024 * 1024,         # safe on v5e/v6e/v7x
        ),
    )(seed_arr, x2)

    return out.reshape(-1)[:total].reshape(orig_shape)


if __name__ == "__main__":
    key = jax.random.PRNGKey(0)
    # Small NCHW input consistent with the elementwise module: (2, 4, 16, 16)
    x = jax.random.normal(key, (2, 4, 16, 16), dtype=jnp.float32)

    y = alpha_drop(x, seed=0, training=True)
    y = jax.block_until_ready(y)

    assert y.shape == x.shape and y.dtype == x.dtype

    # Every output element is either a*x + b (kept) or a*alpha + b (dropped).
    kept_val = x * A_CONST + B_CONST
    is_kept = jnp.isclose(y, kept_val, atol=1e-5)
    is_dropped = jnp.isclose(y, DROPPED_VAL, atol=1e-5)
    assert bool(jnp.all(is_kept | is_dropped))

    # Drop fraction should be roughly p = 0.05 (loose bound to avoid flakiness).
    drop_frac = float(jnp.mean(is_dropped & ~is_kept))
    assert 0.0 < drop_frac < 0.2, f"unexpected drop fraction {drop_frac}"

    # Eval-mode path: identity.
    y_eval = alpha_drop(x, seed=0, training=False)
    assert bool(jnp.all(y_eval == x))

    print("KERNEL_OK")
</pallas_src>

<mosaic_0001>
module attributes {stable_mosaic.version = 11 : i64} {
  func.func @alpha_drop_kernel(%arg0: i32, %arg1: memref<1xi32, #tpu.memory_space<smem>>, %arg2: memref<8x512xf32, #tpu.memory_space<vmem>>, %arg3: memref<8x512xf32, #tpu.memory_space<vmem>>) attributes {dimension_semantics = [#tpu.dimension_semantics<parallel>], iteration_bounds = array<i64: 1>, scalar_prefetch = 1 : i64, scratch_operands = 0 : i64, tpu.core_type = #tpu.core_type<tc>, window_params = [{transform_indices = @transform_0, window_bounds = array<i64: 8, 512>}, {transform_indices = @transform_1, window_bounds = array<i64: 8, 512>}]} {
    %0 = tpu.iota {dimensions = array<i32: 0>} : vector<8x512xi32>
    %c8_i32 = arith.constant 8 : i32
    %1 = arith.muli %arg0, %c8_i32 : i32
    %2 = vector.broadcast %1 : i32 to vector<8x512xi32>
    %3 = arith.addi %0, %2 : vector<8x512xi32>
    %4 = tpu.iota {dimensions = array<i32: 1>} : vector<8x512xi32>
    %c512_i32 = arith.constant 512 : i32
    %5 = vector.broadcast %c512_i32 : i32 to vector<8x512xi32>
    %6 = arith.muli %3, %5 : vector<8x512xi32>
    %7 = arith.addi %6, %4 : vector<8x512xi32>
    %c0 = arith.constant 0 : index
    %8 = memref.load %arg1[%c0] : memref<1xi32, #tpu.memory_space<smem>>
    %c1_i32 = arith.constant 1 : i32
    %9 = arith.addi %8, %c1_i32 : i32
    %c-1640531527_i32 = arith.constant -1640531527 : i32
    %10 = arith.muli %9, %c-1640531527_i32 : i32
    %11 = vector.broadcast %10 : i32 to vector<8x512xi32>
    %12 = arith.addi %7, %11 : vector<8x512xi32>
    %c16_i32 = arith.constant 16 : i32
    %13 = vector.broadcast %c16_i32 : i32 to vector<8x512xi32>
    %14 = arith.shrui %12, %13 : vector<8x512xi32>
    %15 = arith.xori %12, %14 : vector<8x512xi32>
    %c2146121005_i32 = arith.constant 2146121005 : i32
    %16 = vector.broadcast %c2146121005_i32 : i32 to vector<8x512xi32>
    %17 = arith.muli %15, %16 : vector<8x512xi32>
    %c15_i32 = arith.constant 15 : i32
    %18 = vector.broadcast %c15_i32 : i32 to vector<8x512xi32>
    %19 = arith.shrui %17, %18 : vector<8x512xi32>
    %20 = arith.xori %17, %19 : vector<8x512xi32>
    %c-2073254261_i32 = arith.constant -2073254261 : i32
    %21 = vector.broadcast %c-2073254261_i32 : i32 to vector<8x512xi32>
    %22 = arith.muli %20, %21 : vector<8x512xi32>
    %c16_i32_0 = arith.constant 16 : i32
    %23 = vector.broadcast %c16_i32_0 : i32 to vector<8x512xi32>
    %24 = arith.shrui %22, %23 : vector<8x512xi32>
    %25 = arith.xori %22, %24 : vector<8x512xi32>
    %c8_i32_1 = arith.constant 8 : i32
    %26 = vector.broadcast %c8_i32_1 : i32 to vector<8x512xi32>
    %27 = arith.shrui %25, %26 : vector<8x512xi32>
    %c838861_i32 = arith.constant 838861 : i32
    %28 = vector.broadcast %c838861_i32 : i32 to vector<8x512xi32>
    %29 = arith.cmpi sge, %27, %28 : vector<8x512xi32>
    %c0_2 = arith.constant 0 : index
    %c0_3 = arith.constant 0 : index
    %30 = vector.load %arg2[%c0_2, %c0_3] : memref<8x512xf32, #tpu.memory_space<vmem>>, vector<8x512xf32>
    %cst = arith.constant 0.954844474 : f32
    %31 = vector.broadcast %cst : f32 to vector<8x512xf32>
    %32 = arith.mulf %30, %31 : vector<8x512xf32>
    %cst_4 = arith.constant 0.0839355737 : f32
    %33 = vector.broadcast %cst_4 : f32 to vector<8x512xf32>
    %34 = arith.addf %32, %33 : vector<8x512xf32>
    %cst_5 = arith.constant -1.59477592 : f32
    %35 = vector.broadcast %cst_5 : f32 to vector<8x512xf32>
    %36 = arith.select %29, %34, %35 : vector<8x512xi1>, vector<8x512xf32>
    %c0_6 = arith.constant 0 : index
    %c0_7 = arith.constant 0 : index
    %37 = vector.load %arg3[%c0_6, %c0_7] : memref<8x512xf32, #tpu.memory_space<vmem>>, vector<8x512xf32>
    tpu.vector_store %arg3[%c0_6, %c0_7], %36 {strides = array<i32>} : memref<8x512xf32, #tpu.memory_space<vmem>>, vector<8x512xf32>,
    return
  }
  func.func @transform_0(%arg0: i32, %arg1: memref<1xi32, #tpu.memory_space<smem>>) -> (i32, i32) {
    %c0_i32 = arith.constant 0 : i32
    %c0_i32_0 = arith.constant 0 : i32
    return %arg0, %c0_i32 : i32, i32
  }
  func.func @transform_1(%arg0: i32, %arg1: memref<1xi32, #tpu.memory_space<smem>>) -> (i32, i32) {
    %c0_i32 = arith.constant 0 : i32
    %c0_i32_0 = arith.constant 0 : i32
    return %arg0, %c0_i32 : i32, i32
  }
}

</mosaic_0001>

<llo_original>
// kernel: tpu_custom_call.1
$region0: #{tpu_custom_call.1}
  #allocation0 [shape = 'u32[]', space=smem, size = 0x4, offset = 0x4, fixed_abs, tag = 'smem constant byte address 0x4 - core index']
  #allocation1 [shape = 'u32[72,128]{1,0:T(1,128)}', space=vmem, size = 0x9000, scoped, tag = 'internal scratch']
  #allocation2 [shape = 's32[1]{0}', space=sflag, size = 0x4, scoped, tag = 'scoped memory for tpu_custom_call.1']
  #allocation3 [shape = 's32[1]{0:T(128)S(6)}', space=smem, size = 0x200, scoped, tag = 'prefetched SMEM operand 0']
  %s0 = inlined_call_operand.<no memory space> [shape: s32[1], index: 0, kind: input, shape index: {}]
  %s1 = inlined_call_operand.hbm [shape: f32[8,512], index: 1, kind: input, shape index: {}]
  %s2 = inlined_call_operand.hbm [shape: f32[8,512], index: 2, kind: output, shape index: {}]
  %s3 = sld [smem:[#allocation0]]
  $region18: #{tpu_custom_call.1} parent=0
    _
  %s5 = ssub.s32 1, %s3
  %s6 = scalar_select 0, %s5, %s3
  %7 = sst [smem:[#allocation3]] %s0
  $region1: #{tpu_custom_call.1} parent=0
    #allocation4 [shape = 'u8[16384]{0}', space=vmem, size = 0x4000, scoped, tag = 'input window, operand 1, single buffered']
    #allocation5 [shape = 's32[1]{0}', space=sflag, size = 0x4, scoped, tag = 'scoped memory for tpu_custom_call.1']
    #allocation6 [shape = 's32[1]{0}', space=sflag, size = 0x4, scoped, tag = 'scoped memory for tpu_custom_call.1']
    #allocation7 [shape = 'u8[16384]{0}', space=vmem, size = 0x4000, scoped, tag = 'output window, operand 0, single buffered']
    %8 = vsyncpa [#allocation5], 0
    %9 = vsyncpa [#allocation6], 0
    // Predicated region
    $region2: #{tpu_custom_call.1} parent=1 // pred_check
      _
    $region3: #{tpu_custom_call.1} parent=1 // pred_check_branch
      %11 = sbr.rel (0) target = $region5
    $region4: #{tpu_custom_call.1} parent=1 // pred_region
      %13 = vsyncadd [#allocation5], 0
      %s15 = sshll.u32 %s1, 4
      %s16 = int_to_ptr.hbm [resolvable:$true] %s15
      %s17 = sshll.u32 [#allocation4], 4
      %s18 = int_to_ptr.vmem [resolvable:$true] %s17
      %20 = dma.hbm_to_vmem [thread:$0]  %s16, 512, %s18, [#allocation5]
    $region5: #{tpu_custom_call.1} parent=1 // pred_fallthru
      _
    // Predicated region
    $region6: #{tpu_custom_call.1} parent=1 // pred_check
      _
    $region7: #{tpu_custom_call.1} parent=1 // pred_check_branch
      %22 = sbr.rel (0) target = $region9
    $region8: #{tpu_custom_call.1} parent=1 // pred_region
      %24 = dma.done [#allocation5], 512
    $region9: #{tpu_custom_call.1} parent=1 // pred_fallthru
      _
    %v25 = vlaneseq
    %v26 = vshrl.u32 %v25, 7
    %s27 = smul.u32 0, 8
    %v28 = vstv %s27
    %v29 = vadd.s32 %v26, %v28
    %v30 = vlaneseq
    %v31 = vand.u32 %v30, 127
    %v32 = vadd.s32 %v31, 128
    %v33 = vadd.s32 %v31, 256
    %v34 = vadd.s32 %v31, 384
    %v35 = vmul.u32 %v29, 512
    %v36 = vadd.s32 %v35, %v31
    %v37 = vadd.s32 %v35, %v32
    %v38 = vadd.s32 %v35, %v33
    %v39 = vadd.s32 %v35, %v34
    %s40 = sld [smem:[#allocation3]]
    %s41 = sadd.s32 %s40, 1
    %s42 = smul.u32 %s41, 2654435769
    %v43 = vstv %s42
    %v44 = vadd.s32 %v36, %v43
    %v45 = vadd.s32 %v37, %v43
    %v46 = vadd.s32 %v38, %v43
    %v47 = vadd.s32 %v39, %v43
    %v48 = vshrl.u32 %v44, 16
    %v49 = vshrl.u32 %v45, 16
    %v50 = vshrl.u32 %v46, 16
    %v51 = vshrl.u32 %v47, 16
    %v52 = vxor.u32 %v44, %v48
    %v53 = vxor.u32 %v45, %v49
    %v54 = vxor.u32 %v46, %v50
    %v55 = vxor.u32 %v47, %v51
    %v56 = vmul.u32 %v52, 2146121005
    %v57 = vmul.u32 %v53, 2146121005
    %v58 = vmul.u32 %v54, 2146121005
    %v59 = vmul.u32 %v55, 2146121005
    %v60 = vshrl.u32 %v56, 15
    %v61 = vshrl.u32 %v57, 15
    %v62 = vshrl.u32 %v58, 15
    %v63 = vshrl.u32 %v59, 15
    %v64 = vxor.u32 %v56, %v60
    %v65 = vxor.u32 %v57, %v61
    %v66 = vxor.u32 %v58, %v62
    %v67 = vxor.u32 %v59, %v63
    %v68 = vmul.u32 %v64, 2221713035
    %v69 = vmul.u32 %v65, 2221713035
    %v70 = vmul.u32 %v66, 2221713035
    %v71 = vmul.u32 %v67, 2221713035
    %v72 = vshrl.u32 %v68, 16
    %v73 = vshrl.u32 %v69, 16
    %v74 = vshrl.u32 %v70, 16
    %v75 = vshrl.u32 %v71, 16
    %v76 = vxor.u32 %v68, %v72
    %v77 = vxor.u32 %v69, %v73
    %v78 = vxor.u32 %v70, %v74
    %v79 = vxor.u32 %v71, %v75
    %v80 = vshrl.u32 %v76, 8
    %v81 = vshrl.u32 %v77, 8
    %v82 = vshrl.u32 %v78, 8
    %v83 = vshrl.u32 %v79, 8
    %vm84 = vcmp.ge.s32.totalorder %v80, 838861
    %vm85 = vcmp.ge.s32.totalorder %v81, 838861
    %vm86 = vcmp.ge.s32.totalorder %v82, 838861
    %vm87 = vcmp.ge.s32.totalorder %v83, 838861
    %v88 = vld [vmem:[#allocation4] sm:$0xff]
    %v89 = vld [vmem:[#allocation4 + $0x8] sm:$0xff]
    %v90 = vld [vmem:[#allocation4 + $0x10] sm:$0xff]
    %v91 = vld [vmem:[#allocation4 + $0x18] sm:$0xff]
    %v92 = vmul.f32 %v88, 0.9548445
    %v93 = vmul.f32 %v89, 0.9548445
    %v94 = vmul.f32 %v90, 0.9548445
    %v95 = vmul.f32 %v91, 0.9548445
    %v96 = vadd.f32 %v92, 0.08393557
    %v97 = vadd.f32 %v93, 0.08393557
    %v98 = vadd.f32 %v94, 0.08393557
    %v99 = vadd.f32 %v95, 0.08393557
    %v100 = vsel %vm84, %v96, -1.5947759
    %v101 = vsel %vm85, %v97, -1.5947759
    %v102 = vsel %vm86, %v98, -1.5947759
    %v103 = vsel %vm87, %v99, -1.5947759
    %104 = vst [vmem:[#allocation7] sm:$0xff] %v100
    %105 = vst [vmem:[#allocation7 + $0x8] sm:$0xff] %v101
    %106 = vst [vmem:[#allocation7 + $0x10] sm:$0xff] %v102
    %107 = vst [vmem:[#allocation7 + $0x18] sm:$0xff] %v103
    // Predicated region
    $region10: #{tpu_custom_call.1} parent=1 // pred_check
      _
    $region11: #{tpu_custom_call.1} parent=1 // pred_check_branch
      %109 = sbr.rel (0) target = $region13
    $region12: #{tpu_custom_call.1} parent=1 // pred_region
      %111 = vsyncadd [#allocation6], 0
      %s113 = sshll.u32 [#allocation7], 4
      %s114 = int_to_ptr.vmem [resolvable:$true] %s113
      %s115 = sshll.u32 %s2, 4
      %s116 = int_to_ptr.hbm [resolvable:$true] %s115
      %118 = dma.vmem_to_hbm [thread:$0]  %s114, 512, %s116, [#allocation6]
    $region13: #{tpu_custom_call.1} parent=1 // pred_fallthru
      _
    // Predicated region
    $region14: #{tpu_custom_call.1} parent=1 // pred_check
      _
    $region15: #{tpu_custom_call.1} parent=1 // pred_check_branch
      %120 = sbr.rel (0) target = $region17
    $region16: #{tpu_custom_call.1} parent=1 // pred_region
      %122 = dma.done [#allocation6], 512
    $region17: #{tpu_custom_call.1} parent=1 // pred_fallthru
      _
    %123 = vsyncpa [#allocation5], 1
    %124 = vsyncpa [#allocation6], 1

</llo_original>
